<compile_context>
chip_gen: v5e
topology: v5e:2x2
jax: 0.10.0
libtpu: 0.0.40
codegen_flags: <defaults>
</compile_context>

<pallas_src>
import functools

import jax
import jax.numpy as jnp
from jax.experimental import pallas as pl
from jax.experimental.pallas import tpu as pltpu

_EPS = 1e-5
_VMEM_LIMIT_BYTES = 48 * 1024 * 1024   # < 64 MiB (v7x physical), > 16 MiB (v5e default)
_MAX_TB = 4096                         # v7x-safe ceiling for the batch tile


def _mlp_kernel(x_ref,
                w1_ref, b1_ref,
                w2_ref, b2_ref,
                w3_ref, b3_ref,
                o_ref):
    # Layer 1: Linear(12,128) [BN folded] + ReLU      (Dropout = identity, eval)
    h = jnp.dot(x_ref[...].astype(w1_ref.dtype), w1_ref[...],
                preferred_element_type=jnp.float32)
    h = jnp.maximum(h + b1_ref[...], 0.0)

    # Layer 2: Linear(128,128) [BN folded] + ReLU     (Dropout = identity, eval)
    h = jnp.dot(h.astype(w2_ref.dtype), w2_ref[...],
                preferred_element_type=jnp.float32)
    h = jnp.maximum(h + b2_ref[...], 0.0)

    # Layer 3: Linear(128,64->128 lane-padded) [BN folded] + ReLU
    h = jnp.dot(h.astype(w3_ref.dtype), w3_ref[...],
                preferred_element_type=jnp.float32)
    h = jnp.maximum(h + b3_ref[...], 0.0)

    # Full 128-lane, unmasked store; padded columns are exactly zero.
    o_ref[...] = h.astype(o_ref.dtype)


def _round_up(n, m):
    return ((n + m - 1) // m) * m


def _batch_dim_semantics():
    """CORE_PARALLEL on v7x (2 TC/chip) so the grid shards across cores."""
    try:
        kind = jax.devices()[0].device_kind.lower()
        if "v7" in kind:
            return (pltpu.CORE_PARALLEL,)
    except Exception:  # pragma: no cover - defensive; fall back to portable value
        pass
    return ("parallel",)


@functools.partial(jax.jit, static_argnames=("tb", "out_dtype"))
def feat_l_hnsc_forward(x, folded_params, *, tb=2048, out_dtype=jnp.bfloat16):
    """x: [B, 12] float32 -> [B, 64] out_dtype (eval-mode forward)."""
    B, F = x.shape
    assert F == 12, "feat_L_HNSC expects 12 input features"
    w1, b1, w2, b2, w3, b3 = folded_params

    # Tile the batch axis; cap for tiny batches and for v7x VMEM, pad remainder.
    # VMEM per step (double-buffered, lane-padded): x tile pads 12->128 lanes
    # (tb*128*4 B), out tile is tb*128*2 B -> ~tb*1.25 KiB/buffer, plus ~tb*1 KiB
    # of intermediates; tb=4096 stays well inside the 48 MiB limit below.
    tb = max(8, min(tb, _MAX_TB, _round_up(B, 8)))
    grid = pl.cdiv(B, tb)
    b_pad = grid * tb
    if b_pad != B:
        x = jnp.pad(x, ((0, b_pad - B), (0, 0)))

    def full(shape):
        return pl.BlockSpec(shape, lambda i: (0, 0))

    grid_spec = pltpu.PrefetchScalarGridSpec(
        num_scalar_prefetch=0,
        grid=(grid,),
        in_specs=[
            pl.BlockSpec((tb, 12), lambda i: (i, 0)),      # x tile (lane-padded in VMEM)
            full((12, 128)), full((1, 128)),               # layer 1 (folded)
            full((128, 128)), full((1, 128)),              # layer 2 (folded)
            full((128, 128)), full((1, 128)),              # layer 3 (folded, lane-padded)
        ],
        out_specs=pl.BlockSpec((tb, 128), lambda i: (i, 0)),
    )

    flops = 2 * b_pad * (12 * 128 + 128 * 128 + 128 * 128)
    bytes_accessed = (
        b_pad * 12 * 4                                      # x in (f32)
        + b_pad * 128 * jnp.dtype(out_dtype).itemsize       # y out (lane-padded)
        + (12 * 128 + 128 * 128 + 128 * 128) * 2            # bf16 weights
        + (128 + 128 + 128) * 4                             # f32 biases
    )

    out = pl.pallas_call(
        _mlp_kernel,
        out_shape=jax.ShapeDtypeStruct((b_pad, 128), out_dtype),
        grid_spec=grid_spec,
        compiler_params=pltpu.CompilerParams(
            dimension_semantics=_batch_dim_semantics(),
            vmem_limit_bytes=_VMEM_LIMIT_BYTES),
        cost_estimate=pl.CostEstimate(
            flops=flops, transcendentals=0, bytes_accessed=bytes_accessed),
    )(x, w1, b1, w2, b2, w3, b3)

    # Strip the batch padding and the zero-valued lane padding (cols 64..127).
    return out[:B, :64]


# ---------------------------------------------------------------------------
# Parameter construction (mirrors the PyTorch module init) and constant folding
# ---------------------------------------------------------------------------

def _xavier_uniform(key, fan_in, fan_out):
    # torch.nn.init.xavier_uniform_ on a [out, in] weight; stored as [in, out].
    limit = jnp.sqrt(6.0 / (fan_in + fan_out))
    return jax.random.uniform(key, (fan_in, fan_out), jnp.float32, -limit, limit)


def _linear_bias(key, fan_in, fan_out):
    # PyTorch Linear default bias init: U(-1/sqrt(fan_in), 1/sqrt(fan_in))
    bound = 1.0 / jnp.sqrt(fan_in)
    return jax.random.uniform(key, (fan_out,), jnp.float32, -bound, bound)


def make_raw_params(key):
    """Per-layer (W[in,out], b[out], gamma, beta, running_mean, running_var)."""
    dims = [(12, 128), (128, 128), (128, 64)]
    keys = jax.random.split(key, 6 * len(dims))
    layers = []
    for li, (fi, fo) in enumerate(dims):
        kw, kb, kg, kbe, km, kv = keys[6 * li:6 * li + 6]
        w = _xavier_uniform(kw, fi, fo)
        b = _linear_bias(kb, fi, fo)
        gamma = 1.0 + 0.1 * jax.random.normal(kg, (fo,), jnp.float32)
        beta = 0.1 * jax.random.normal(kbe, (fo,), jnp.float32)
        mean = 0.1 * jax.random.normal(km, (fo,), jnp.float32)
        var = jnp.abs(1.0 + 0.1 * jax.random.normal(kv, (fo,), jnp.float32))
        layers.append((w, b, gamma, beta, mean, var))
    return layers


def fold_params(raw_layers, *, compute_dtype=jnp.bfloat16, eps=_EPS):
    """One-time fold of Linear bias + BN(eval) affine into (W', b') per layer.

    The last layer's output dim is zero-padded 64 -> 128 so the kernel's output
    is lane-dense (unmasked full-lane stores); padded columns are exactly zero
    after ReLU and are sliced off in the wrapper.
    """
    folded = []
    n_layers = len(raw_layers)
    for li, (w, b, gamma, beta, mean, var) in enumerate(raw_layers):
        scale = gamma / jnp.sqrt(var + eps)                  # [out]
        w_f = (w * scale[None, :]).astype(compute_dtype)     # [in, out]
        b_f = ((b - mean) * scale + beta).astype(jnp.float32)[None, :]
        if li == n_layers - 1:
            out_pad = 128 - w_f.shape[1]
            if out_pad > 0:
                w_f = jnp.pad(w_f, ((0, 0), (0, out_pad)))
                b_f = jnp.pad(b_f, ((0, 0), (0, out_pad)))
        folded.extend([w_f, b_f])
    return tuple(folded)


# ---------------------------------------------------------------------------
# References
# ---------------------------------------------------------------------------

def reference_forward_f32(x, raw_layers, eps=_EPS):
    """Pure-f32 eval-mode forward of the original module (unfolded)."""
    h = x
    for (w, b, gamma, beta, mean, var) in raw_layers:
        h = h @ w + b[None, :]
        h = (h - mean[None, :]) / jnp.sqrt(var[None, :] + eps)
        h = h * gamma[None, :] + beta[None, :]
        h = jnp.maximum(h, 0.0)
    return h


def reference_forward_folded(x, folded_params):
    """Same folded/bf16 math path as the kernel (for a tight numerical check)."""
    w1, b1, w2, b2, w3, b3 = folded_params
    h = jnp.maximum(jnp.dot(x.astype(w1.dtype), w1,
                            preferred_element_type=jnp.float32) + b1, 0.0)
    h = jnp.maximum(jnp.dot(h.astype(w2.dtype), w2,
                            preferred_element_type=jnp.float32) + b2, 0.0)
    h = jnp.maximum(jnp.dot(h.astype(w3.dtype), w3,
                            preferred_element_type=jnp.float32) + b3, 0.0)
    return h[:, :64]


if __name__ == "__main__":
    key = jax.random.PRNGKey(0)
    kx, kx2, kp = jax.random.split(key, 3)

    raw = make_raw_params(kp)
    folded = fold_params(raw)

    # Small batch (multiple of 8).
    B = 16
    x = jax.random.normal(kx, (B, 12), jnp.float32)
    out = jax.block_until_ready(feat_l_hnsc_forward(x, folded))
    assert out.shape == (B, 64)
    assert out.dtype == jnp.bfloat16

    out_f32 = out.astype(jnp.float32)

    # Tight check: kernel vs identical folded/bf16 math path (only the final
    # bf16 output cast differs).
    ref_folded = reference_forward_folded(x, folded)
    assert jnp.allclose(out_f32, ref_folded, atol=2e-2, rtol=2e-2)

    # Loose check: kernel (bf16 weights/activations/output) vs pure-f32 module math.
    ref_f32 = reference_forward_f32(x, raw)
    assert jnp.allclose(out_f32, ref_f32, atol=1e-1, rtol=1e-1)

    # Ragged batch exercises the pl.cdiv grid + padded final tile path.
    B2 = 13
    x2 = jax.random.normal(kx2, (B2, 12), jnp.float32)
    out2 = jax.block_until_ready(feat_l_hnsc_forward(x2, folded))
    assert out2.shape == (B2, 64)
    assert jnp.allclose(out2.astype(jnp.float32),
                        reference_forward_folded(x2, folded),
                        atol=2e-2, rtol=2e-2)

    print("KERNEL_OK")
</pallas_src>

<mosaic_0001>
module attributes {stable_mosaic.version = 11 : i64} {
  func.func @_mlp_kernel(%arg0: i32, %arg1: memref<16x12xf32, #tpu.memory_space<vmem>>, %arg2: memref<12x128xbf16, #tpu.memory_space<vmem>>, %arg3: memref<1x128xf32, #tpu.memory_space<vmem>>, %arg4: memref<128x128xbf16, #tpu.memory_space<vmem>>, %arg5: memref<1x128xf32, #tpu.memory_space<vmem>>, %arg6: memref<128x128xbf16, #tpu.memory_space<vmem>>, %arg7: memref<1x128xf32, #tpu.memory_space<vmem>>, %arg8: memref<16x128xbf16, #tpu.memory_space<vmem>>) attributes {dimension_semantics = [#tpu.dimension_semantics<parallel>], iteration_bounds = array<i64: 1>, scalar_prefetch = 0 : i64, scratch_operands = 0 : i64, tpu.core_type = #tpu.core_type<tc>, window_params = [{transform_indices = @transform_0, window_bounds = array<i64: 16, 12>}, {pipeline_mode = #tpu.pipeline_mode<synchronous>, transform_indices = @transform_1, window_bounds = array<i64: 12, 128>}, {pipeline_mode = #tpu.pipeline_mode<synchronous>, transform_indices = @transform_2, window_bounds = array<i64: 1, 128>}, {pipeline_mode = #tpu.pipeline_mode<synchronous>, transform_indices = @transform_3, window_bounds = array<i64: 128, 128>}, {pipeline_mode = #tpu.pipeline_mode<synchronous>, transform_indices = @transform_4, window_bounds = array<i64: 1, 128>}, {pipeline_mode = #tpu.pipeline_mode<synchronous>, transform_indices = @transform_5, window_bounds = array<i64: 128, 128>}, {pipeline_mode = #tpu.pipeline_mode<synchronous>, transform_indices = @transform_6, window_bounds = array<i64: 1, 128>}, {transform_indices = @transform_7, window_bounds = array<i64: 16, 128>}]} {
    %c0 = arith.constant 0 : index
    %c0_0 = arith.constant 0 : index
    %0 = vector.load %arg1[%c0, %c0_0] : memref<16x12xf32, #tpu.memory_space<vmem>>, vector<16x12xf32>
    %1 = arith.truncf %0 : vector<16x12xf32> to vector<16x12xbf16>
    %c0_1 = arith.constant 0 : index
    %c0_2 = arith.constant 0 : index
    %2 = vector.load %arg2[%c0_1, %c0_2] : memref<12x128xbf16, #tpu.memory_space<vmem>>, vector<12x128xbf16>
    %cst = arith.constant dense<0.000000e+00> : vector<16x128xf32>
    %3 = tpu.matmul %1, %2, %cst {dimension_numbers = #tpu.dot_dimension_numbers<[1], [0], [0], [1], [0, 0, 1, 1], [], []>} : vector<16x12xbf16>, vector<12x128xbf16>, vector<16x128xf32> -> vector<16x128xf32>
    %c0_3 = arith.constant 0 : index
    %c0_4 = arith.constant 0 : index
    %4 = vector.load %arg3[%c0_3, %c0_4] : memref<1x128xf32, #tpu.memory_space<vmem>>, vector<1x128xf32>
    %5 = vector.broadcast %4 : vector<1x128xf32> to vector<16x128xf32>
    %6 = arith.addf %3, %5 : vector<16x128xf32>
    %cst_5 = arith.constant 0.000000e+00 : f32
    %7 = vector.broadcast %cst_5 : f32 to vector<16x128xf32>
    %8 = arith.maximumf %6, %7 : vector<16x128xf32>
    %9 = arith.truncf %8 : vector<16x128xf32> to vector<16x128xbf16>
    %c0_6 = arith.constant 0 : index
    %c0_7 = arith.constant 0 : index
    %10 = vector.load %arg4[%c0_6, %c0_7] : memref<128x128xbf16, #tpu.memory_space<vmem>>, vector<128x128xbf16>
    %cst_8 = arith.constant dense<0.000000e+00> : vector<16x128xf32>
    %11 = tpu.matmul %9, %10, %cst_8 {dimension_numbers = #tpu.dot_dimension_numbers<[1], [0], [0], [1], [0, 0, 1, 1], [], []>} : vector<16x128xbf16>, vector<128x128xbf16>, vector<16x128xf32> -> vector<16x128xf32>
    %c0_9 = arith.constant 0 : index
    %c0_10 = arith.constant 0 : index
    %12 = vector.load %arg5[%c0_9, %c0_10] : memref<1x128xf32, #tpu.memory_space<vmem>>, vector<1x128xf32>
    %13 = vector.broadcast %12 : vector<1x128xf32> to vector<16x128xf32>
    %14 = arith.addf %11, %13 : vector<16x128xf32>
    %cst_11 = arith.constant 0.000000e+00 : f32
    %15 = vector.broadcast %cst_11 : f32 to vector<16x128xf32>
    %16 = arith.maximumf %14, %15 : vector<16x128xf32>
    %17 = arith.truncf %16 : vector<16x128xf32> to vector<16x128xbf16>
    %c0_12 = arith.constant 0 : index
    %c0_13 = arith.constant 0 : index
    %18 = vector.load %arg6[%c0_12, %c0_13] : memref<128x128xbf16, #tpu.memory_space<vmem>>, vector<128x128xbf16>
    %cst_14 = arith.constant dense<0.000000e+00> : vector<16x128xf32>
    %19 = tpu.matmul %17, %18, %cst_14 {dimension_numbers = #tpu.dot_dimension_numbers<[1], [0], [0], [1], [0, 0, 1, 1], [], []>} : vector<16x128xbf16>, vector<128x128xbf16>, vector<16x128xf32> -> vector<16x128xf32>
    %c0_15 = arith.constant 0 : index
    %c0_16 = arith.constant 0 : index
    %20 = vector.load %arg7[%c0_15, %c0_16] : memref<1x128xf32, #tpu.memory_space<vmem>>, vector<1x128xf32>
    %21 = vector.broadcast %20 : vector<1x128xf32> to vector<16x128xf32>
    %22 = arith.addf %19, %21 : vector<16x128xf32>
    %cst_17 = arith.constant 0.000000e+00 : f32
    %23 = vector.broadcast %cst_17 : f32 to vector<16x128xf32>
    %24 = arith.maximumf %22, %23 : vector<16x128xf32>
    %25 = arith.truncf %24 : vector<16x128xf32> to vector<16x128xbf16>
    %c0_18 = arith.constant 0 : index
    %c0_19 = arith.constant 0 : index
    %26 = vector.load %arg8[%c0_18, %c0_19] : memref<16x128xbf16, #tpu.memory_space<vmem>>, vector<16x128xbf16>
    tpu.vector_store %arg8[%c0_18, %c0_19], %25 {strides = array<i32>} : memref<16x128xbf16, #tpu.memory_space<vmem>>, vector<16x128xbf16>,
    return
  }
  func.func @transform_0(%arg0: i32) -> (i32, i32) {
    %c0_i32 = arith.constant 0 : i32
    %c0_i32_0 = arith.constant 0 : i32
    return %arg0, %c0_i32 : i32, i32
  }
  func.func @transform_1(%arg0: i32) -> (i32, i32) {
    %c0_i32 = arith.constant 0 : i32
    %c0_i32_0 = arith.constant 0 : i32
    %c0_i32_1 = arith.constant 0 : i32
    return %c0_i32, %c0_i32_0 : i32, i32
  }
  func.func @transform_2(%arg0: i32) -> (i32, i32) {
    %c0_i32 = arith.constant 0 : i32
    %c0_i32_0 = arith.constant 0 : i32
    %c0_i32_1 = arith.constant 0 : i32
    return %c0_i32, %c0_i32_0 : i32, i32
  }
  func.func @transform_3(%arg0: i32) -> (i32, i32) {
    %c0_i32 = arith.constant 0 : i32
    %c0_i32_0 = arith.constant 0 : i32
    %c0_i32_1 = arith.constant 0 : i32
    return %c0_i32, %c0_i32_0 : i32, i32
  }
  func.func @transform_4(%arg0: i32) -> (i32, i32) {
    %c0_i32 = arith.constant 0 : i32
    %c0_i32_0 = arith.constant 0 : i32
    %c0_i32_1 = arith.constant 0 : i32
    return %c0_i32, %c0_i32_0 : i32, i32
  }
  func.func @transform_5(%arg0: i32) -> (i32, i32) {
    %c0_i32 = arith.constant 0 : i32
    %c0_i32_0 = arith.constant 0 : i32
    %c0_i32_1 = arith.constant 0 : i32
    return %c0_i32, %c0_i32_0 : i32, i32
  }
  func.func @transform_6(%arg0: i32) -> (i32, i32) {
    %c0_i32 = arith.constant 0 : i32
    %c0_i32_0 = arith.constant 0 : i32
    %c0_i32_1 = arith.constant 0 : i32
    return %c0_i32, %c0_i32_0 : i32, i32
  }
  func.func @transform_7(%arg0: i32) -> (i32, i32) {
    %c0_i32 = arith.constant 0 : i32
    %c0_i32_0 = arith.constant 0 : i32
    return %arg0, %c0_i32 : i32, i32
  }
}

</mosaic_0001>

<llo_original>
// kernel: feat_l_hnsc_forward.1
$region0: #{feat_l_hnsc_forward.1}
  #allocation0 [shape = 'u32[]', space=smem, size = 0x4, offset = 0x4, fixed_abs, tag = 'smem constant byte address 0x4 - core index']
  #allocation1 [shape = 'u32[72,128]{1,0:T(1,128)}', space=vmem, size = 0x9000, scoped, tag = 'internal scratch']
  %s0 = inlined_call_operand.hbm [shape: f32[16,12], index: 0, kind: input, shape index: {}]
  %s1 = inlined_call_operand.hbm [shape: bf16[12,128], index: 1, kind: input, shape index: {}]
  %s2 = inlined_call_operand.vmem [shape: f32[1,128], index: 2, kind: input, shape index: {}]
  %s3 = inlined_call_operand.hbm [shape: bf16[128,128], index: 3, kind: input, shape index: {}]
  %s4 = inlined_call_operand.vmem [shape: f32[1,128], index: 4, kind: input, shape index: {}]
  %s5 = inlined_call_operand.hbm [shape: bf16[128,128], index: 5, kind: input, shape index: {}]
  %s6 = inlined_call_operand.vmem [shape: f32[1,128], index: 6, kind: input, shape index: {}]
  %s7 = inlined_call_operand.hbm [shape: bf16[16,128], index: 7, kind: output, shape index: {}]
  %s8 = sld [smem:[#allocation0]]
  $region54: #{feat_l_hnsc_forward.1} parent=0
    _
  %s10 = ssub.s32 1, %s8
  %s11 = scalar_select 0, %s10, %s8
  $region1: #{feat_l_hnsc_forward.1} parent=0
    #allocation2 [shape = 'u8[8192]{0}', space=vmem, size = 0x2000, scoped, tag = 'input window, operand 0, single buffered']
    #allocation3 [shape = 's32[1]{0}', space=sflag, size = 0x4, scoped, tag = 'scoped memory for feat_l_hnsc_forward.1']
    #allocation4 [shape = 's32[1]{0}', space=sflag, size = 0x4, scoped, tag = 'scoped memory for feat_l_hnsc_forward.1']
    #allocation5 [shape = 'u8[4096]{0}', space=vmem, size = 0x1000, scoped, tag = 'input window, operand 1, single buffered']
    #allocation6 [shape = 's32[1]{0}', space=sflag, size = 0x4, scoped, tag = 'scoped memory for feat_l_hnsc_forward.1']
    #allocation7 [shape = 'u8[32768]{0}', space=vmem, size = 0x8000, scoped, tag = 'input window, operand 3, single buffered']
    #allocation8 [shape = 'u8[32768]{0}', space=vmem, size = 0x8000, scoped, tag = 'input window, operand 5, single buffered']
    #allocation9 [shape = 's32[1]{0}', space=sflag, size = 0x4, scoped, tag = 'scoped memory for feat_l_hnsc_forward.1']
    #allocation10 [shape = 'u8[4096]{0}', space=vmem, size = 0x1000, scoped, tag = 'output window, operand 0, single buffered']
    %12 = vsyncpa [#allocation3], 0
    %13 = vsyncpa [#allocation6], 0
    %14 = vsyncpa [#allocation9], 0
    %15 = vsyncpa [#allocation4], 0
    // Predicated region
    $region2: #{feat_l_hnsc_forward.1} parent=1 // pred_check
      _
    $region3: #{feat_l_hnsc_forward.1} parent=1 // pred_check_branch
      %17 = sbr.rel (0) target = $region5
    $region4: #{feat_l_hnsc_forward.1} parent=1 // pred_region
      %19 = vsyncadd [#allocation3], 0
      %s20 = sshll.u32 %s0, 4
      %s21 = int_to_ptr.hbm [resolvable:$true] %s20
      %s22 = sshll.u32 [#allocation2], 4
      %s23 = int_to_ptr.vmem [resolvable:$true] %s22
      %28 = dma.hbm_to_vmem [thread:$0]  %s21, 256, %s23, [#allocation3], 128, 128, 8
    $region5: #{feat_l_hnsc_forward.1} parent=1 // pred_fallthru
      _
    // Predicated region
    $region6: #{feat_l_hnsc_forward.1} parent=1 // pred_check
      _
    $region7: #{feat_l_hnsc_forward.1} parent=1 // pred_check_branch
      %30 = sbr.rel (0) target = $region9
    $region8: #{feat_l_hnsc_forward.1} parent=1 // pred_region
      %32 = vsyncadd [#allocation6], 0
      %s33 = sshll.u32 %s1, 4
      %s34 = int_to_ptr.hbm [resolvable:$true] %s33
      %s35 = sshll.u32 [#allocation5], 4
      %s36 = int_to_ptr.vmem [resolvable:$true] %s35
      %41 = dma.hbm_to_vmem [thread:$0]  %s34, 128, %s36, [#allocation6], 64, 64, 4
    $region9: #{feat_l_hnsc_forward.1} parent=1 // pred_fallthru
      _
    // Predicated region
    $region10: #{feat_l_hnsc_forward.1} parent=1 // pred_check
      _
    $region11: #{feat_l_hnsc_forward.1} parent=1 // pred_check_branch
      %43 = sbr.rel (0) target = $region13
    $region12: #{feat_l_hnsc_forward.1} parent=1 // pred_region
      _
    $region13: #{feat_l_hnsc_forward.1} parent=1 // pred_fallthru
      _
    // Predicated region
    $region14: #{feat_l_hnsc_forward.1} parent=1 // pred_check
      _
    $region15: #{feat_l_hnsc_forward.1} parent=1 // pred_check_branch
      %45 = sbr.rel (0) target = $region17
    $region16: #{feat_l_hnsc_forward.1} parent=1 // pred_region
      %47 = vsyncadd [#allocation6], 0
      %s48 = sshll.u32 %s3, 4
      %s49 = int_to_ptr.hbm [resolvable:$true] %s48
      %s50 = sshll.u32 [#allocation7], 4
      %s51 = int_to_ptr.vmem [resolvable:$true] %s50
      %56 = dma.hbm_to_vmem [thread:$0]  %s49, 1024, %s51, [#allocation6], 64, 64, 4
    $region17: #{feat_l_hnsc_forward.1} parent=1 // pred_fallthru
      _
    // Predicated region
    $region18: #{feat_l_hnsc_forward.1} parent=1 // pred_check
      _
    $region19: #{feat_l_hnsc_forward.1} parent=1 // pred_check_branch
      %58 = sbr.rel (0) target = $region21
    $region20: #{feat_l_hnsc_forward.1} parent=1 // pred_region
      _
    $region21: #{feat_l_hnsc_forward.1} parent=1 // pred_fallthru
      _
    // Predicated region
    $region22: #{feat_l_hnsc_forward.1} parent=1 // pred_check
      _
    $region23: #{feat_l_hnsc_forward.1} parent=1 // pred_check_branch
      %60 = sbr.rel (0) target = $region25
    $region24: #{feat_l_hnsc_forward.1} parent=1 // pred_region
      %62 = vsyncadd [#allocation9], 0
      %s63 = sshll.u32 %s5, 4
      %s64 = int_to_ptr.hbm [resolvable:$true] %s63
      %s65 = sshll.u32 [#allocation8], 4
      %s66 = int_to_ptr.vmem [resolvable:$true] %s65
      %71 = dma.hbm_to_vmem [thread:$0]  %s64, 1024, %s66, [#allocation9], 64, 64, 4
    $region25: #{feat_l_hnsc_forward.1} parent=1 // pred_fallthru
      _
    // Predicated region
    $region26: #{feat_l_hnsc_forward.1} parent=1 // pred_check
      _
    $region27: #{feat_l_hnsc_forward.1} parent=1 // pred_check_branch
      %73 = sbr.rel (0) target = $region29
    $region28: #{feat_l_hnsc_forward.1} parent=1 // pred_region
      _
    $region29: #{feat_l_hnsc_forward.1} parent=1 // pred_fallthru
      _
    // Predicated region
    $region30: #{feat_l_hnsc_forward.1} parent=1 // pred_check
      _
    $region31: #{feat_l_hnsc_forward.1} parent=1 // pred_check_branch
      %75 = sbr.rel (0) target = $region33
    $region32: #{feat_l_hnsc_forward.1} parent=1 // pred_region
      %77 = dma.done [#allocation3], 256
    $region33: #{feat_l_hnsc_forward.1} parent=1 // pred_fallthru
      _
    // Predicated region
    $region34: #{feat_l_hnsc_forward.1} parent=1 // pred_check
      _
    $region35: #{feat_l_hnsc_forward.1} parent=1 // pred_check_branch
      %79 = sbr.rel (0) target = $region37
    $region36: #{feat_l_hnsc_forward.1} parent=1 // pred_region
      %81 = dma.done [#allocation6], 128
    $region37: #{feat_l_hnsc_forward.1} parent=1 // pred_fallthru
      _
    // Predicated region
    $region38: #{feat_l_hnsc_forward.1} parent=1 // pred_check
      _
    $region39: #{feat_l_hnsc_forward.1} parent=1 // pred_check_branch
      %83 = sbr.rel (0) target = $region41
    $region40: #{feat_l_hnsc_forward.1} parent=1 // pred_region
      %85 = dma.done [#allocation6], 1024
    $region41: #{feat_l_hnsc_forward.1} parent=1 // pred_fallthru
      _
    // Predicated region
    $region42: #{feat_l_hnsc_forward.1} parent=1 // pred_check
      _
    $region43: #{feat_l_hnsc_forward.1} parent=1 // pred_check_branch
      %87 = sbr.rel (0) target = $region45
    $region44: #{feat_l_hnsc_forward.1} parent=1 // pred_region
      %89 = dma.done [#allocation9], 1024
    $region45: #{feat_l_hnsc_forward.1} parent=1 // pred_fallthru
      _
    %v91 = vld [vmem:[#allocation2] sm:$0xff]
    %v92 = vld [vmem:[#allocation2 + $0x8] sm:$0xff]
    %v93 = vpack.c.bf16 %v92, %v91
    %v94 = vld [vmem:[#allocation5] sm:$0xf]
    %v95 = vld [vmem:[#allocation5 + $0x4] sm:$0x3]
    %v96 = vld [vmem:[%s2] sm:$0x1]
    %v98 = vperm.slane %v96, 0
    %v102 = vunpack.c.l.b16 %v94
    %v103 = vunpack.c.l.b16 %v95
    %v104 = vpack.c.b16 %v103, %v102
    %vm105 = vcmask 97280
    %v107 = vsel %vm105, %v93, 0
    %vm109 = vcmask 1045504
    %v111 = vsel %vm109, %v104, 0
    %113 = vmatpush.bf16.msra.mxu0 0
    %114 = vmatpush.bf16.msra.mxu0 0
    %115 = vmatpush.bf16.msra.mxu0 0
    %116 = vmatpush.bf16.msra.mxu0 0
    %117 = vmatpush.bf16.msra.mxu0 0
    %118 = vmatpush.bf16.msra.mxu0 0
    %119 = vmatpush.bf16.msra.mxu0 0
    %120 = vmatpush.bf16.msra.mxu0 %v111
    %121 = vmatmul.bf16.gmra.mxu0 %v107
    %v122 = vpop.f32.mrf.mxu0
    %v123 = vadd.f32 %v98, %v122
    %v124 = vpop.f32.mrf.mxu0
    %v125 = vadd.f32 %v98, %v124
    %126 = vdwg.mxu0
    %v127 = vmax.f32 %v123, 0.0
    %v128 = vmax.f32 %v125, 0.0
    %v129 = vpack.c.bf16 %v128, %v127
    %v130 = vld [vmem:[#allocation7] sm:$0xf]
    %v131 = vld [vmem:[#allocation7 + $0x4] sm:$0xf]
    %v132 = vld [vmem:[#allocation7 + $0x8] sm:$0xf]
    %v133 = vld [vmem:[#allocation7 + $0xc] sm:$0xf]
    %v134 = vld [vmem:[#allocation7 + $0x10] sm:$0xf]
    %v135 = vld [vmem:[#allocation7 + $0x14] sm:$0xf]
    %v136 = vld [vmem:[#allocation7 + $0x18] sm:$0xf]
    %v137 = vld [vmem:[#allocation7 + $0x1c] sm:$0xf]
    %v138 = vld [vmem:[#allocation7 + $0x20] sm:$0xf]
    %v139 = vld [vmem:[#allocation7 + $0x24] sm:$0xf]
    %v140 = vld [vmem:[#allocation7 + $0x28] sm:$0xf]
    %v141 = vld [vmem:[#allocation7 + $0x2c] sm:$0xf]
    %v142 = vld [vmem:[#allocation7 + $0x30] sm:$0xf]
    %v143 = vld [vmem:[#allocation7 + $0x34] sm:$0xf]
    %v144 = vld [vmem:[#allocation7 + $0x38] sm:$0xf]
    %v145 = vld [vmem:[#allocation7 + $0x3c] sm:$0xf]
    %v146 = vld [vmem:[%s4] sm:$0x1]
    %v148 = vperm.slane %v146, 0
    %v166 = vunpack.c.l.b16 %v130
    %v167 = vunpack.c.l.b16 %v131
    %v168 = vunpack.c.l.b16 %v132
    %v169 = vunpack.c.l.b16 %v133
    %v170 = vunpack.c.l.b16 %v134
    %v171 = vunpack.c.l.b16 %v135
    %v172 = vunpack.c.l.b16 %v136
    %v173 = vunpack.c.l.b16 %v137
    %v174 = vunpack.c.l.b16 %v138
    %v175 = vunpack.c.l.b16 %v139
    %v176 = vunpack.c.l.b16 %v140
    %v177 = vunpack.c.l.b16 %v141
    %v178 = vunpack.c.l.b16 %v142
    %v179 = vunpack.c.l.b16 %v143
    %v180 = vunpack.c.l.b16 %v144
    %v181 = vunpack.c.l.b16 %v145
    %v182 = vpack.c.b16 %v167, %v166
    %v183 = vpack.c.b16 %v169, %v168
    %v184 = vpack.c.b16 %v171, %v170
    %v185 = vpack.c.b16 %v173, %v172
    %v186 = vpack.c.b16 %v175, %v174
    %v187 = vpack.c.b16 %v177, %v176
    %v188 = vpack.c.b16 %v179, %v178
    %v189 = vpack.c.b16 %v181, %v180
    %198 = vmatpush.bf16.msra.mxu0 %v189
    %199 = vmatpush.bf16.msra.mxu0 %v188
    %200 = vmatpush.bf16.msra.mxu0 %v187
    %201 = vmatpush.bf16.msra.mxu0 %v186
    %202 = vmatpush.bf16.msra.mxu0 %v185
    %203 = vmatpush.bf16.msra.mxu0 %v184
    %204 = vmatpush.bf16.msra.mxu0 %v183
    %205 = vmatpush.bf16.msra.mxu0 %v182
    %206 = vmatmul.bf16.gmra.mxu0 %v129
    %v207 = vpop.f32.mrf.mxu0
    %v208 = vadd.f32 %v148, %v207
    %v209 = vpop.f32.mrf.mxu0
    %v210 = vadd.f32 %v148, %v209
    %211 = vdwg.mxu0
    %v212 = vmax.f32 %v208, 0.0
    %v213 = vmax.f32 %v210, 0.0
    %v214 = vpack.c.bf16 %v213, %v212
    %v215 = vld [vmem:[#allocation8] sm:$0xf]
    %v216 = vld [vmem:[#allocation8 + $0x4] sm:$0xf]
    %v217 = vld [vmem:[#allocation8 + $0x8] sm:$0xf]
    %v218 = vld [vmem:[#allocation8 + $0xc] sm:$0xf]
    %v219 = vld [vmem:[#allocation8 + $0x10] sm:$0xf]
    %v220 = vld [vmem:[#allocation8 + $0x14] sm:$0xf]
    %v221 = vld [vmem:[#allocation8 + $0x18] sm:$0xf]
    %v222 = vld [vmem:[#allocation8 + $0x1c] sm:$0xf]
    %v223 = vld [vmem:[#allocation8 + $0x20] sm:$0xf]
    %v224 = vld [vmem:[#allocation8 + $0x24] sm:$0xf]
    %v225 = vld [vmem:[#allocation8 + $0x28] sm:$0xf]
    %v226 = vld [vmem:[#allocation8 + $0x2c] sm:$0xf]
    %v227 = vld [vmem:[#allocation8 + $0x30] sm:$0xf]
    %v228 = vld [vmem:[#allocation8 + $0x34] sm:$0xf]
    %v229 = vld [vmem:[#allocation8 + $0x38] sm:$0xf]
    %v230 = vld [vmem:[#allocation8 + $0x3c] sm:$0xf]
    %v231 = vld [vmem:[%s6] sm:$0x1]
    %v233 = vperm.slane %v231, 0
    %v251 = vunpack.c.l.b16 %v215
    %v252 = vunpack.c.l.b16 %v216
    %v253 = vunpack.c.l.b16 %v217
    %v254 = vunpack.c.l.b16 %v218
    %v255 = vunpack.c.l.b16 %v219
    %v256 = vunpack.c.l.b16 %v220
    %v257 = vunpack.c.l.b16 %v221
    %v258 = vunpack.c.l.b16 %v222
    %v259 = vunpack.c.l.b16 %v223
    %v260 = vunpack.c.l.b16 %v224
    %v261 = vunpack.c.l.b16 %v225
    %v262 = vunpack.c.l.b16 %v226
    %v263 = vunpack.c.l.b16 %v227
    %v264 = vunpack.c.l.b16 %v228
    %v265 = vunpack.c.l.b16 %v229
    %v266 = vunpack.c.l.b16 %v230
    %v267 = vpack.c.b16 %v252, %v251
    %v268 = vpack.c.b16 %v254, %v253
    %v269 = vpack.c.b16 %v256, %v255
    %v270 = vpack.c.b16 %v258, %v257
    %v271 = vpack.c.b16 %v260, %v259
    %v272 = vpack.c.b16 %v262, %v261
    %v273 = vpack.c.b16 %v264, %v263
    %v274 = vpack.c.b16 %v266, %v265
    %283 = vmatpush.bf16.msra.mxu0 %v274
    %284 = vmatpush.bf16.msra.mxu0 %v273
    %285 = vmatpush.bf16.msra.mxu0 %v272
    %286 = vmatpush.bf16.msra.mxu0 %v271
    %287 = vmatpush.bf16.msra.mxu0 %v270
    %288 = vmatpush.bf16.msra.mxu0 %v269
    %289 = vmatpush.bf16.msra.mxu0 %v268
    %290 = vmatpush.bf16.msra.mxu0 %v267
    %291 = vmatmul.bf16.gmra.mxu0 %v214
    %v292 = vpop.f32.mrf.mxu0
    %v293 = vadd.f32 %v233, %v292
    %v294 = vpop.f32.mrf.mxu0
    %v295 = vadd.f32 %v233, %v294
    %296 = vdwg.mxu0
    %v297 = vmax.f32 %v293, 0.0
    %v298 = vmax.f32 %v295, 0.0
    %v299 = vpack.c.bf16 %v297, %v297
    %v300 = vpack.c.bf16 %v298, %v298
    %301 = vst [vmem:[#allocation10] sm:$0xf] %v299
    %302 = vst [vmem:[#allocation10 + $0x4] sm:$0xf] %v300
    // Predicated region
    $region46: #{feat_l_hnsc_forward.1} parent=1 // pred_check
      _
    $region47: #{feat_l_hnsc_forward.1} parent=1 // pred_check_branch
      %304 = sbr.rel (0) target = $region49
    $region48: #{feat_l_hnsc_forward.1} parent=1 // pred_region
      %306 = vsyncadd [#allocation4], 0
      %s307 = sshll.u32 [#allocation10], 4
      %s308 = int_to_ptr.vmem [resolvable:$true] %s307
      %s309 = sshll.u32 %s7, 4
      %s310 = int_to_ptr.hbm [resolvable:$true] %s309
      %315 = dma.vmem_to_hbm [thread:$0]  %s308, 128, %s310, [#allocation4], 64, 64, 4
    $region49: #{feat_l_hnsc_forward.1} parent=1 // pred_fallthru
      _
    // Predicated region
    $region50: #{feat_l_hnsc_forward.1} parent=1 // pred_check
      _
    $region51: #{feat_l_hnsc_forward.1} parent=1 // pred_check_branch
      %317 = sbr.rel (0) target = $region53
    $region52: #{feat_l_hnsc_forward.1} parent=1 // pred_region
      %319 = dma.done [#allocation4], 128
    $region53: #{feat_l_hnsc_forward.1} parent=1 // pred_fallthru
      _
    %320 = vsyncpa [#allocation3], 1
    %321 = vsyncpa [#allocation6], 1
    %322 = vsyncpa [#allocation9], 1
    %323 = vsyncpa [#allocation4], 1

</llo_original>
